<compile_context>
chip_gen: v7x
topology: tpu7x:2x2x1
jax: 0.10.0
libtpu: 0.0.40
codegen_flags: <defaults>
</compile_context>

<pallas_src>
import math

import jax
import jax.numpy as jnp
from jax.experimental import pallas as pl
from jax.experimental.pallas import tpu as pltpu

EPS = 1e-6

# Per-block VMEM budget for the input tile.  Input + output, each
# double-buffered -> peak ~= 4 * block_bytes, comfortably < 32 MiB scoped
# VMEM (and well inside v7x's 64 MiB physical VMEM).
_TARGET_BLOCK_BYTES = 4 * 1024 * 1024
_MAX_TILE_ROWS = 2048


def _layer_norm_kernel(alpha_ref, bias_ref, x_ref, o_ref):
    # x_ref block: (TS, D) — rows on the sublane axis, D on the lane axis.
    x = x_ref[...].astype(jnp.float32)
    d = x.shape[-1]                      # NOTE: d must be > 1 (Bessel N-1)
    mean = jnp.mean(x, axis=-1, keepdims=True)
    diff = x - mean
    # torch.std defaults to the unbiased (Bessel, N-1) estimator.
    var = jnp.sum(diff * diff, axis=-1, keepdims=True) / (d - 1)
    std = jnp.sqrt(var)
    denom = std + EPS
    # Approximate reciprocal runs on the otherwise-idle EUP slot; one Newton
    # step on the tiny (TS, 1) column restores ~f32 accuracy.
    inv = pl.reciprocal(denom, approx=True)
    inv = inv * (2.0 - denom * inv)
    scale = alpha_ref[0] * inv           # fold alpha into the per-row scale
    y = diff * scale + bias_ref[0]
    o_ref[...] = y.astype(o_ref.dtype)


def _pick_tile_rows(n_rows, d, itemsize):
    if n_rows <= 8:
        return n_rows                    # full-extent block, no (8,128) issue
    by_budget = _TARGET_BLOCK_BYTES // max(d * itemsize, 1)
    ts = min(n_rows, _MAX_TILE_ROWS, max(by_budget, 8))
    return max(8, (ts // 8) * 8)         # sublane-aligned tile


def layer_norm(x, alpha, bias):
    """Pallas implementation of LayerNormalization.forward over x[..., D]."""
    orig_shape = x.shape
    D = orig_shape[-1]
    n_rows = math.prod(orig_shape[:-1])
    x2 = x.reshape(n_rows, D)

    ts = _pick_tile_rows(n_rows, D, x.dtype.itemsize)
    padded_rows = pl.cdiv(n_rows, ts) * ts
    if padded_rows != n_rows:
        # Rows are normalized independently; zero-padded rows are sliced off.
        x2 = jnp.pad(x2, ((0, padded_rows - n_rows), (0, 0)))

    out = pl.pallas_call(
        _layer_norm_kernel,
        out_shape=jax.ShapeDtypeStruct((padded_rows, D), x.dtype),
        grid=(padded_rows // ts,),
        in_specs=[
            pl.BlockSpec(memory_space=pltpu.MemorySpace.SMEM),  # alpha (1,)
            pl.BlockSpec(memory_space=pltpu.MemorySpace.SMEM),  # bias  (1,)
            pl.BlockSpec((ts, D), lambda i: (i, 0)),
        ],
        out_specs=pl.BlockSpec((ts, D), lambda i: (i, 0)),
        compiler_params=pltpu.CompilerParams(
            dimension_semantics=("parallel",),    # shard rows across v7x's 2 TCs
            vmem_limit_bytes=32 * 1024 * 1024,    # explicit; > v5e's 16 MiB default
        ),
    )(alpha, bias, x2)

    if padded_rows != n_rows:
        out = out[:n_rows]
    return out.reshape(orig_shape)


if __name__ == "__main__":
    key = jax.random.PRNGKey(0)
    B, S, D = 2, 8, 32

    x = jax.random.normal(key, (B, S, D), dtype=jnp.float32)

    # Matches nn.Parameter(torch.tensor(1)) / nn.Parameter(torch.tensor(0))
    # promoted to float for the arithmetic.
    alpha = jnp.array([1.0], dtype=jnp.float32)
    bias = jnp.array([0.0], dtype=jnp.float32)

    out = layer_norm(x, alpha, bias)
    jax.block_until_ready(out)

    # Sanity check against a pure-JAX reference (unbiased std, eps on std).
    mean = jnp.mean(x, axis=-1, keepdims=True)
    std = jnp.sqrt(jnp.sum((x - mean) ** 2, axis=-1, keepdims=True) / (D - 1))
    ref = 1.0 * (x - mean) / (std + EPS) + 0.0
    assert jnp.allclose(out, ref, atol=1e-4, rtol=1e-4), (
        float(jnp.max(jnp.abs(out - ref))))

    print("KERNEL_OK")
</pallas_src>

<mosaic_0001>
module attributes {stable_mosaic.version = 11 : i64} {
  func.func @_layer_norm_kernel(%arg0: i32, %arg1: memref<1xf32, #tpu.memory_space<smem>>, %arg2: memref<1xf32, #tpu.memory_space<smem>>, %arg3: memref<16x32xf32, #tpu.memory_space<vmem>>, %arg4: memref<16x32xf32, #tpu.memory_space<vmem>>) attributes {dimension_semantics = [#tpu.dimension_semantics<parallel>], iteration_bounds = array<i64: 1>, scalar_prefetch = 0 : i64, scratch_operands = 0 : i64, tpu.core_type = #tpu.core_type<tc>, window_params = [{transform_indices = @transform_0, window_bounds = array<i64: 1>}, {transform_indices = @transform_1, window_bounds = array<i64: 1>}, {transform_indices = @transform_2, window_bounds = array<i64: 16, 32>}, {transform_indices = @transform_3, window_bounds = array<i64: 16, 32>}]} {
    %c0 = arith.constant 0 : index
    %c0_0 = arith.constant 0 : index
    %0 = vector.load %arg3[%c0, %c0_0] : memref<16x32xf32, #tpu.memory_space<vmem>>, vector<16x32xf32>
    %cst = arith.constant dense<0.000000e+00> : vector<16xf32>
    %1 = vector.multi_reduction <add>, %0, %cst [1] : vector<16x32xf32> to vector<16xf32>
    %2 = vector.shape_cast %1 : vector<16xf32> to vector<16x1xf32>
    %cst_1 = arith.constant 3.200000e+01 : f32
    %3 = vector.broadcast %cst_1 : f32 to vector<16x1xf32>
    %4 = arith.divf %2, %3 : vector<16x1xf32>
    %5 = vector.broadcast %4 : vector<16x1xf32> to vector<16x32xf32>
    %6 = arith.subf %0, %5 : vector<16x32xf32>
    %7 = arith.mulf %6, %6 : vector<16x32xf32>
    %cst_2 = arith.constant dense<0.000000e+00> : vector<16xf32>
    %8 = vector.multi_reduction <add>, %7, %cst_2 [1] : vector<16x32xf32> to vector<16xf32>
    %9 = vector.shape_cast %8 : vector<16xf32> to vector<16x1xf32>
    %cst_3 = arith.constant 3.100000e+01 : f32
    %10 = vector.broadcast %cst_3 : f32 to vector<16x1xf32>
    %11 = arith.divf %9, %10 : vector<16x1xf32>
    %12 = math.sqrt %11 : vector<16x1xf32>
    %cst_4 = arith.constant 9.99999997E-7 : f32
    %13 = vector.broadcast %cst_4 : f32 to vector<16x1xf32>
    %14 = arith.addf %12, %13 : vector<16x1xf32>
    %15 = tpu.reciprocal %14 {approx = true} : vector<16x1xf32> -> vector<16x1xf32>
    %16 = arith.mulf %14, %15 : vector<16x1xf32>
    %cst_5 = arith.constant 2.000000e+00 : f32
    %17 = vector.broadcast %cst_5 : f32 to vector<16x1xf32>
    %18 = arith.subf %17, %16 : vector<16x1xf32>
    %19 = arith.mulf %15, %18 : vector<16x1xf32>
    %c0_6 = arith.constant 0 : index
    %20 = memref.load %arg1[%c0_6] : memref<1xf32, #tpu.memory_space<smem>>
    %21 = vector.broadcast %20 : f32 to vector<16x1xf32>
    %22 = arith.mulf %21, %19 : vector<16x1xf32>
    %23 = vector.broadcast %22 : vector<16x1xf32> to vector<16x32xf32>
    %24 = arith.mulf %6, %23 : vector<16x32xf32>
    %c0_7 = arith.constant 0 : index
    %25 = memref.load %arg2[%c0_7] : memref<1xf32, #tpu.memory_space<smem>>
    %26 = vector.broadcast %25 : f32 to vector<16x32xf32>
    %27 = arith.addf %24, %26 : vector<16x32xf32>
    %c0_8 = arith.constant 0 : index
    %c0_9 = arith.constant 0 : index
    %28 = vector.load %arg4[%c0_8, %c0_9] : memref<16x32xf32, #tpu.memory_space<vmem>>, vector<16x32xf32>
    tpu.vector_store %arg4[%c0_8, %c0_9], %27 {strides = array<i32>} : memref<16x32xf32, #tpu.memory_space<vmem>>, vector<16x32xf32>,
    return
  }
  func.func @transform_0(%arg0: i32) -> i32 {
    %c0_i32 = arith.constant 0 : i32
    %c0_i32_0 = arith.constant 0 : i32
    return %c0_i32 : i32
  }
  func.func @transform_1(%arg0: i32) -> i32 {
    %c0_i32 = arith.constant 0 : i32
    %c0_i32_0 = arith.constant 0 : i32
    return %c0_i32 : i32
  }
  func.func @transform_2(%arg0: i32) -> (i32, i32) {
    %c0_i32 = arith.constant 0 : i32
    %c0_i32_0 = arith.constant 0 : i32
    return %arg0, %c0_i32 : i32, i32
  }
  func.func @transform_3(%arg0: i32) -> (i32, i32) {
    %c0_i32 = arith.constant 0 : i32
    %c0_i32_0 = arith.constant 0 : i32
    return %arg0, %c0_i32 : i32, i32
  }
}

</mosaic_0001>

<llo_original>
// kernel: tpu_custom_call.1
$region0: #{tpu_custom_call.1}
  #allocation0 [shape = 'u32[]', space=smem, size = 0x4, offset = 0x4, fixed_abs, tag = 'smem constant byte address 0x4 - core index']
  #allocation1 [shape = 'u32[144,128]{1,0:T(1,128)}', space=vmem, size = 0x12000, scoped, tag = 'internal scratch']
  #allocation2 [shape = 'f32[1]{0:T(128)S(6)}', space=smem, size = 0x200, scoped, tag = 'scoped memory for tpu_custom_call.1']
  #allocation3 [shape = 'f32[1]{0:T(128)S(6)}', space=smem, size = 0x200, scoped, tag = 'scoped memory for tpu_custom_call.1']
  %s0 = inlined_call_operand.<no memory space> [shape: f32[1], index: 0, kind: input, shape index: {}]
  %s1 = inlined_call_operand.<no memory space> [shape: f32[1], index: 1, kind: input, shape index: {}]
  %s2 = inlined_call_operand.hbm [shape: f32[16,32], index: 2, kind: input, shape index: {}]
  %s3 = inlined_call_operand.hbm [shape: f32[16,32], index: 3, kind: output, shape index: {}]
  %s4 = sld [smem:[#allocation0]]
  $region26: #{tpu_custom_call.1} parent=0
    _
  %s6 = ssub.s32 1, %s4
  %s7 = scalar_select 0, %s6, %s4
  %8 = sst [smem:[#allocation2]] %s0
  %9 = sst [smem:[#allocation3]] %s1
  $region1: #{tpu_custom_call.1} parent=0
    #allocation4 [shape = 'u8[8192]{0}', space=vmem, size = 0x2000, scoped, tag = 'input window, operand 2, single buffered']
    #allocation5 [shape = 's32[1]{0}', space=sflag, size = 0x4, scoped, tag = 'scoped memory for tpu_custom_call.1']
    #allocation6 [shape = 's32[1]{0}', space=sflag, size = 0x4, scoped, tag = 'scoped memory for tpu_custom_call.1']
    #allocation7 [shape = 'u8[8192]{0}', space=vmem, size = 0x2000, scoped, tag = 'output window, operand 0, single buffered']
    %10 = vsyncpa [#allocation5], 0
    %11 = vsyncpa [#allocation6], 0
    // Predicated region
    $region2: #{tpu_custom_call.1} parent=1 // pred_check
      _
    $region3: #{tpu_custom_call.1} parent=1 // pred_check_branch
      %13 = sbr.rel (0) target = $region5
    $region4: #{tpu_custom_call.1} parent=1 // pred_region
      _
    $region5: #{tpu_custom_call.1} parent=1 // pred_fallthru
      _
    // Predicated region
    $region6: #{tpu_custom_call.1} parent=1 // pred_check
      _
    $region7: #{tpu_custom_call.1} parent=1 // pred_check_branch
      %15 = sbr.rel (0) target = $region9
    $region8: #{tpu_custom_call.1} parent=1 // pred_region
      _
    $region9: #{tpu_custom_call.1} parent=1 // pred_fallthru
      _
    // Predicated region
    $region10: #{tpu_custom_call.1} parent=1 // pred_check
      _
    $region11: #{tpu_custom_call.1} parent=1 // pred_check_branch
      %17 = sbr.rel (0) target = $region13
    $region12: #{tpu_custom_call.1} parent=1 // pred_region
      %s19 = ssub.s32 256, 256
      %20 = vsyncadd [#allocation5], %s19
      %s21 = sshll.u32 [#allocation4], 4
      %s22 = int_to_ptr.vmem [resolvable:$true] %s21
      %27 = dma.hbm_to_vmem [thread:$0]  %s2, 256, %s22, [#allocation5], 128, 128, 8
    $region13: #{tpu_custom_call.1} parent=1 // pred_fallthru
      _
    // Predicated region
    $region14: #{tpu_custom_call.1} parent=1 // pred_check
      _
    $region15: #{tpu_custom_call.1} parent=1 // pred_check_branch
      %29 = sbr.rel (0) target = $region17
    $region16: #{tpu_custom_call.1} parent=1 // pred_region
      %30 = dma.done [#allocation5], 256
    $region17: #{tpu_custom_call.1} parent=1 // pred_fallthru
      _
    %v31 = vld [vmem:[#allocation4] sm:$0xff]
    %v32 = vld [vmem:[#allocation4 + $0x8] sm:$0xff]
    %vm33 = vcmask 261120
    %v34 = vsel %vm33, %v31, 0.0
    %35 = vadd.xlane.f32.xlu0 %v34
    %v36 = vpop.xlane.xlu0 %35
    %v37 = vsel %vm33, %v32, 0.0
    %38 = vadd.xlane.f32.xlu0 %v37
    %v39 = vpop.xlane.xlu0 %38
    %v40 = vrcp.pop 32.0
    %v41 = vmul.f32 %v36, %v40
    %v42 = vmul.f32 %v39, %v40
    %v43 = vsub.f32 %v31, %v41
    %v44 = vsub.f32 %v32, %v42
    %v45 = vmul.f32 %v43, %v43
    %v46 = vmul.f32 %v44, %v44
    %v47 = vsel %vm33, %v45, 0.0
    %48 = vadd.xlane.f32.xlu0 %v47
    %v49 = vpop.xlane.xlu0 %48
    %v50 = vsel %vm33, %v46, 0.0
    %51 = vadd.xlane.f32.xlu0 %v50
    %v52 = vpop.xlane.xlu0 %51
    %v53 = vrcp.pop 31.0
    %v54 = vmul.f32 %v49, %v53
    %v55 = vmul.f32 %v52, %v53
    %v56 = vrsqrt.pop %v54
    %v57 = vmul.f32 %v54, %v56
    %vm58 = vcmp.eq.f32.partialorder %v54, inf
    %v59 = vsel %vm58, %v54, %v57
    %vm60 = vcmp.eq.f32.partialorder %v54, 0.0
    %v61 = vand.u32 %v54, 2147483648
    %v62 = vsel %vm60, %v61, %v59
    %v63 = vrsqrt.pop %v55
    %v64 = vmul.f32 %v55, %v63
    %vm65 = vcmp.eq.f32.partialorder %v55, inf
    %v66 = vsel %vm65, %v55, %v64
    %vm67 = vcmp.eq.f32.partialorder %v55, 0.0
    %v68 = vand.u32 %v55, 2147483648
    %v69 = vsel %vm67, %v68, %v66
    %v70 = vadd.f32 %v62, 1e-06
    %v71 = vadd.f32 %v69, 1e-06
    %v72 = vrcp.pop %v70
    %v73 = vrcp.pop %v71
    %v74 = vmul.f32 %v70, %v72
    %v75 = vmul.f32 %v71, %v73
    %v76 = vsub.f32 2.0, %v74
    %v77 = vsub.f32 2.0, %v75
    %v78 = vmul.f32 %v72, %v76
    %v79 = vmul.f32 %v73, %v77
    %s80 = sld [smem:[#allocation2]]
    %v81 = vstv %s80
    %v82 = vmul.f32 %v81, %v78
    %v83 = vmul.f32 %v81, %v79
    %v84 = vmul.f32 %v43, %v82
    %v85 = vmul.f32 %v44, %v83
    %s86 = sld [smem:[#allocation3]]
    %v87 = vstv %s86
    %v88 = vadd.f32 %v84, %v87
    %v89 = vadd.f32 %v85, %v87
    %90 = vst.msk [vmem:[#allocation7] sm:$0xff] %vm33, %v88
    %91 = vst.msk [vmem:[#allocation7 + $0x8] sm:$0xff] %vm33, %v89
    // Predicated region
    $region18: #{tpu_custom_call.1} parent=1 // pred_check
      _
    $region19: #{tpu_custom_call.1} parent=1 // pred_check_branch
      %93 = sbr.rel (0) target = $region21
    $region20: #{tpu_custom_call.1} parent=1 // pred_region
      %s95 = ssub.s32 256, 256
      %96 = vsyncadd [#allocation6], %s95
      %s97 = sshll.u32 [#allocation7], 4
      %s98 = int_to_ptr.vmem [resolvable:$true] %s97
      %103 = dma.vmem_to_hbm [thread:$0]  %s98, 256, %s3, [#allocation6], 128, 128, 8
    $region21: #{tpu_custom_call.1} parent=1 // pred_fallthru
      _
    // Predicated region
    $region22: #{tpu_custom_call.1} parent=1 // pred_check
      _
    $region23: #{tpu_custom_call.1} parent=1 // pred_check_branch
      %105 = sbr.rel (0) target = $region25
    $region24: #{tpu_custom_call.1} parent=1 // pred_region
      %106 = dma.done [#allocation6], 256
    $region25: #{tpu_custom_call.1} parent=1 // pred_fallthru
      _
    %107 = vsyncpa [#allocation5], 1
    %108 = vsyncpa [#allocation6], 1

</llo_original>
